<compile_context>
chip_gen: v7x
topology: tpu7x:2x2x1
jax: 0.10.0
libtpu: 0.0.40
codegen_flags: <defaults>
</compile_context>

<pallas_src>
import functools

import jax
import jax.numpy as jnp
from jax import lax
from jax.experimental import pallas as pl
from jax.experimental.pallas import tpu as pltpu

LANE = 128
SUBLANE = 8
_TARGET_BLOCK_BYTES = 4 * 1024 * 1024   # ~4 MiB per input block per buffer


def _dice_partial_kernel(p_ref, t_ref, o_ref, *,
                         rows, row_tile, tiles_per_split, needs_mask):
    """Accumulate per-split partial sums for DiceLoss.

    o_ref block: (1, 3, 8, 128) f32, resident across the inner (arbitrary)
    grid axis.  Channel 0 = sum(sigmoid(p)*t), 1 = sum(sigmoid(p)),
    2 = sum(t).  Accumulators stay vreg-shaped so per-step work is cheap VPU
    adds; the single cross-lane reduce happens once in the wrapper.
    """
    c = pl.program_id(0)
    i = pl.program_id(1)

    @pl.when(i == 0)
    def _init():
        o_ref[...] = jnp.zeros_like(o_ref)

    x = p_ref[...].astype(jnp.float32)
    t = t_ref[...].astype(jnp.float32)

    # Numerically-stable sigmoid, EUP-only transcendentals:
    #   z = exp(-|x|) in (0,1]  ->  d = 1+z in [1,2]  ->  r ~ 1/d (EUP vrcp)
    #   + one Newton step (VALU filler, restores f32 accuracy; d in [1,2] so
    #     it is overflow/NaN safe).  sigmoid(x) = r if x>=0 else 1-r.
    z = jnp.exp(-jnp.abs(x))
    d = 1.0 + z
    r = pl.reciprocal(d, approx=True)
    r = r * (2.0 - d * r)                       # Newton refinement (cheap)
    p = jnp.where(x >= 0.0, r, 1.0 - r)

    groups = row_tile // SUBLANE

    def accumulate(p_v, t_v):
        # (row_tile,128) -> (groups,8,128): axis-0 sums are plain vreg adds.
        pt = jnp.sum((p_v * t_v).reshape(groups, SUBLANE, LANE), axis=0)
        ps = jnp.sum(p_v.reshape(groups, SUBLANE, LANE), axis=0)
        ts = jnp.sum(t_v.reshape(groups, SUBLANE, LANE), axis=0)
        o_ref[0, 0] += pt
        o_ref[0, 1] += ps
        o_ref[0, 2] += ts

    if not needs_mask:
        accumulate(p, t)
    else:
        tile_idx = c * tiles_per_split + i
        tile_start = tile_idx * row_tile
        is_full = tile_start + row_tile <= rows

        @pl.when(is_full)
        def _fast():
            accumulate(p, t)

        @pl.when(jnp.logical_not(is_full))
        def _masked():
            # Only the final (ragged) tile and clamped overflow tiles pay for
            # the iota + masking; garbage rows (incl. inf/NaN bit patterns)
            # are zeroed before accumulation.
            row_ids = tile_start + lax.broadcasted_iota(
                jnp.int32, (row_tile, LANE), 0)
            valid = row_ids < rows
            accumulate(jnp.where(valid, p, 0.0), jnp.where(valid, t, 0.0))


def dice_loss(prediction, target, smooth=1e-8):
    """Pallas implementation of DiceLoss.forward. Returns a scalar f32."""
    assert prediction.shape == target.shape

    p_flat = prediction.reshape(-1)
    t_flat = target.reshape(-1)
    if not jnp.issubdtype(p_flat.dtype, jnp.floating):
        p_flat = p_flat.astype(jnp.float32)
    n = p_flat.shape[0]

    # Dtype-aware sublane alignment: native tiles are (8,128) for 4-byte,
    # (16,128) for 2-byte, (32,128) for 1-byte elements.
    min_itemsize = min(p_flat.dtype.itemsize, t_flat.dtype.itemsize)
    sub_align = max(SUBLANE, 32 // max(1, min_itemsize))
    elems_align = sub_align * LANE

    # Aligned prefix goes through the kernel; the (< elems_align) tail is a
    # negligible jnp reduction.  No concatenate / no extra HBM copies.
    n_main = (n // elems_align) * elems_align

    sums = jnp.zeros((3,), jnp.float32)

    if n_main:
        rows = n_main // LANE                      # multiple of sub_align
        p2d = p_flat[:n_main].reshape(rows, LANE)
        t2d = t_flat[:n_main].reshape(rows, LANE)

        # Tile sizing: ~4 MiB per input block (2 inputs x 2 pipeline buffers
        # ~= 16 MiB live) -> safe on v7x (64 MiB VMEM) and amortizes per-step
        # pipeline overhead on all generations.
        itembytes = max(p2d.dtype.itemsize, t2d.dtype.itemsize)
        row_tile = max(sub_align,
                       min(rows, _TARGET_BLOCK_BYTES // (LANE * itembytes)))
        row_tile -= row_tile % sub_align
        n_tiles = pl.cdiv(rows, row_tile)

        # Split the stream across (up to) 2 TensorCores (v7x); on 1-TC chips
        # the parallel axis just runs sequentially with negligible overhead.
        num_splits = 2 if n_tiles >= 8 else 1
        tiles_per_split = pl.cdiv(n_tiles, num_splits)
        needs_mask = (num_splits * tiles_per_split * row_tile != rows)

        kernel = functools.partial(
            _dice_partial_kernel,
            rows=rows, row_tile=row_tile,
            tiles_per_split=tiles_per_split, needs_mask=needs_mask)

        def in_map(c, i):
            # Clamp so overflow tiles on the last split re-read the final
            # block; their contribution is zeroed by the (gated) row mask.
            return (jnp.minimum(c * tiles_per_split + i, n_tiles - 1), 0)

        partials = pl.pallas_call(
            kernel,
            out_shape=jax.ShapeDtypeStruct((num_splits, 3, SUBLANE, LANE),
                                           jnp.float32),
            grid_spec=pltpu.PrefetchScalarGridSpec(
                num_scalar_prefetch=0,
                grid=(num_splits, tiles_per_split),
                in_specs=[
                    pl.BlockSpec((row_tile, LANE), in_map),
                    pl.BlockSpec((row_tile, LANE), in_map),
                ],
                out_specs=pl.BlockSpec((1, 3, SUBLANE, LANE),
                                       lambda c, i: (c, 0, 0, 0)),
            ),
            compiler_params=pltpu.CompilerParams(
                dimension_semantics=("parallel", "arbitrary"),
                vmem_limit_bytes=40 * 1024 * 1024),
            cost_estimate=pl.CostEstimate(
                flops=8 * int(n_main),
                transcendentals=2 * int(n_main),
                bytes_accessed=int(n_main) * (p2d.dtype.itemsize
                                              + t2d.dtype.itemsize)
                               + num_splits * 3 * SUBLANE * LANE * 4),
        )(p2d, t2d)

        # Tiny (<= 6 KiB) finalize reduce of per-split vreg accumulators.
        sums = sums + jnp.sum(partials, axis=(0, 2, 3))

    if n_main < n:
        # < sub_align*128 leftover elements: plain jnp, negligible cost.
        p_tail = jax.nn.sigmoid(p_flat[n_main:].astype(jnp.float32))
        t_tail = t_flat[n_main:].astype(jnp.float32)
        sums = sums + jnp.stack([jnp.sum(p_tail * t_tail),
                                 jnp.sum(p_tail),
                                 jnp.sum(t_tail)])

    intersection = 2.0 * sums[0] + smooth
    union = sums[1] + sums[2] + smooth
    return 1.0 - intersection / union


def dice_loss_ref(prediction, target, smooth=1e-8):
    p = jax.nn.sigmoid(prediction.astype(jnp.float32))
    t = target.astype(jnp.float32)
    intersection = 2.0 * jnp.sum(p * t) + smooth
    union = jnp.sum(p) + jnp.sum(t) + smooth
    return 1.0 - intersection / union


if __name__ == "__main__":
    key = jax.random.PRNGKey(0)
    k1, k2 = jax.random.split(key)

    # NCHW logits and binary targets, small shapes.
    x = jax.random.normal(k1, (2, 4, 16, 16), dtype=jnp.float32)
    tgt = (jax.random.uniform(k2, (2, 4, 16, 16)) > 0.5).astype(jnp.float32)

    loss = jax.block_until_ready(dice_loss(x, tgt))
    ref = jax.block_until_ready(dice_loss_ref(x, tgt))

    assert jnp.allclose(loss, ref, atol=1e-4, rtol=1e-4), (loss, ref)
    print("KERNEL_OK")
</pallas_src>

<mosaic_0001>
module attributes {stable_mosaic.version = 11 : i64} {
  func.func @_dice_partial_kernel(%arg0: i32, %arg1: i32, %arg2: memref<16x128xf32, #tpu.memory_space<vmem>>, %arg3: memref<16x128xf32, #tpu.memory_space<vmem>>, %arg4: memref<1x3x8x128xf32, #tpu.memory_space<vmem>>) attributes {dimension_semantics = [#tpu.dimension_semantics<parallel>, #tpu.dimension_semantics<arbitrary>], iteration_bounds = array<i64: 1, 1>, scalar_prefetch = 0 : i64, scratch_operands = 0 : i64, tpu.core_type = #tpu.core_type<tc>, window_params = [{transform_indices = @transform_0, window_bounds = array<i64: 16, 128>}, {transform_indices = @transform_1, window_bounds = array<i64: 16, 128>}, {transform_indices = @transform_2, window_bounds = array<i64: 1, 3, 8, 128>}]} {
    %c0_i32 = arith.constant 0 : i32
    %0 = arith.cmpi eq, %arg1, %c0_i32 : i32
    %1 = arith.extui %0 : i1 to i32
    %c0_i32_0 = arith.constant 0 : i32
    %2 = arith.cmpi ne, %1, %c0_i32_0 : i32
    scf.if %2 {
      %cst_33 = arith.constant 0.000000e+00 : f32
      %46 = vector.broadcast %cst_33 : f32 to vector<1x3x8x128xf32>
      %c0_34 = arith.constant 0 : index
      %c0_35 = arith.constant 0 : index
      %c0_36 = arith.constant 0 : index
      %c0_37 = arith.constant 0 : index
      %47 = vector.load %arg4[%c0_34, %c0_35, %c0_36, %c0_37] : memref<1x3x8x128xf32, #tpu.memory_space<vmem>>, vector<1x3x8x128xf32>
      tpu.vector_store %arg4[%c0_34, %c0_35, %c0_36, %c0_37], %46 {strides = array<i32>} : memref<1x3x8x128xf32, #tpu.memory_space<vmem>>, vector<1x3x8x128xf32>,
    } else {
    }
    %c0 = arith.constant 0 : index
    %c0_1 = arith.constant 0 : index
    %3 = vector.load %arg2[%c0, %c0_1] : memref<16x128xf32, #tpu.memory_space<vmem>>, vector<16x128xf32>
    %c0_2 = arith.constant 0 : index
    %c0_3 = arith.constant 0 : index
    %4 = vector.load %arg3[%c0_2, %c0_3] : memref<16x128xf32, #tpu.memory_space<vmem>>, vector<16x128xf32>
    %5 = math.absf %3 : vector<16x128xf32>
    %cst = arith.constant 0.000000e+00 : f32
    %6 = vector.broadcast %cst : f32 to vector<16x128xf32>
    %7 = arith.subf %6, %5 : vector<16x128xf32>
    %8 = math.exp %7 : vector<16x128xf32>
    %cst_4 = arith.constant 1.000000e+00 : f32
    %9 = vector.broadcast %cst_4 : f32 to vector<16x128xf32>
    %10 = arith.addf %9, %8 : vector<16x128xf32>
    %11 = tpu.reciprocal %10 {approx = true} : vector<16x128xf32> -> vector<16x128xf32>
    %12 = arith.mulf %10, %11 : vector<16x128xf32>
    %cst_5 = arith.constant 2.000000e+00 : f32
    %13 = vector.broadcast %cst_5 : f32 to vector<16x128xf32>
    %14 = arith.subf %13, %12 : vector<16x128xf32>
    %15 = arith.mulf %11, %14 : vector<16x128xf32>
    %cst_6 = arith.constant 0.000000e+00 : f32
    %16 = vector.broadcast %cst_6 : f32 to vector<16x128xf32>
    %17 = arith.cmpf oge, %3, %16 : vector<16x128xf32>
    %cst_7 = arith.constant 1.000000e+00 : f32
    %18 = vector.broadcast %cst_7 : f32 to vector<16x128xf32>
    %19 = arith.subf %18, %15 : vector<16x128xf32>
    %20 = arith.select %17, %15, %19 : vector<16x128xi1>, vector<16x128xf32>
    %21 = arith.mulf %20, %4 : vector<16x128xf32>
    %22 = vector.shape_cast %21 : vector<16x128xf32> to vector<2x8x128xf32>
    %cst_8 = arith.constant dense<0.000000e+00> : vector<8x128xf32>
    %23 = vector.multi_reduction <add>, %22, %cst_8 [0] : vector<2x8x128xf32> to vector<8x128xf32>
    %24 = vector.shape_cast %20 : vector<16x128xf32> to vector<2x8x128xf32>
    %cst_9 = arith.constant dense<0.000000e+00> : vector<8x128xf32>
    %25 = vector.multi_reduction <add>, %24, %cst_9 [0] : vector<2x8x128xf32> to vector<8x128xf32>
    %26 = vector.shape_cast %4 : vector<16x128xf32> to vector<2x8x128xf32>
    %cst_10 = arith.constant dense<0.000000e+00> : vector<8x128xf32>
    %27 = vector.multi_reduction <add>, %26, %cst_10 [0] : vector<2x8x128xf32> to vector<8x128xf32>
    %c0_11 = arith.constant 0 : index
    %c0_12 = arith.constant 0 : index
    %c0_13 = arith.constant 0 : index
    %c0_14 = arith.constant 0 : index
    %28 = vector.load %arg4[%c0_11, %c0_12, %c0_13, %c0_14] : memref<1x3x8x128xf32, #tpu.memory_space<vmem>>, vector<1x1x8x128xf32>
    %29 = vector.shape_cast %28 : vector<1x1x8x128xf32> to vector<8x128xf32>
    %30 = arith.addf %29, %23 : vector<8x128xf32>
    %c0_15 = arith.constant 0 : index
    %c0_16 = arith.constant 0 : index
    %c0_17 = arith.constant 0 : index
    %c0_18 = arith.constant 0 : index
    %31 = vector.load %arg4[%c0_15, %c0_16, %c0_17, %c0_18] : memref<1x3x8x128xf32, #tpu.memory_space<vmem>>, vector<1x1x8x128xf32>
    %32 = vector.shape_cast %31 : vector<1x1x8x128xf32> to vector<8x128xf32>
    %33 = vector.shape_cast %30 : vector<8x128xf32> to vector<1x1x8x128xf32>
    tpu.vector_store %arg4[%c0_15, %c0_16, %c0_17, %c0_18], %33 {strides = array<i32>} : memref<1x3x8x128xf32, #tpu.memory_space<vmem>>, vector<1x1x8x128xf32>,
    %c0_19 = arith.constant 0 : index
    %c1 = arith.constant 1 : index
    %c0_20 = arith.constant 0 : index
    %c0_21 = arith.constant 0 : index
    %34 = vector.load %arg4[%c0_19, %c1, %c0_20, %c0_21] : memref<1x3x8x128xf32, #tpu.memory_space<vmem>>, vector<1x1x8x128xf32>
    %35 = vector.shape_cast %34 : vector<1x1x8x128xf32> to vector<8x128xf32>
    %36 = arith.addf %35, %25 : vector<8x128xf32>
    %c0_22 = arith.constant 0 : index
    %c1_23 = arith.constant 1 : index
    %c0_24 = arith.constant 0 : index
    %c0_25 = arith.constant 0 : index
    %37 = vector.load %arg4[%c0_22, %c1_23, %c0_24, %c0_25] : memref<1x3x8x128xf32, #tpu.memory_space<vmem>>, vector<1x1x8x128xf32>
    %38 = vector.shape_cast %37 : vector<1x1x8x128xf32> to vector<8x128xf32>
    %39 = vector.shape_cast %36 : vector<8x128xf32> to vector<1x1x8x128xf32>
    tpu.vector_store %arg4[%c0_22, %c1_23, %c0_24, %c0_25], %39 {strides = array<i32>} : memref<1x3x8x128xf32, #tpu.memory_space<vmem>>, vector<1x1x8x128xf32>,
    %c0_26 = arith.constant 0 : index
    %c2 = arith.constant 2 : index
    %c0_27 = arith.constant 0 : index
    %c0_28 = arith.constant 0 : index
    %40 = vector.load %arg4[%c0_26, %c2, %c0_27, %c0_28] : memref<1x3x8x128xf32, #tpu.memory_space<vmem>>, vector<1x1x8x128xf32>
    %41 = vector.shape_cast %40 : vector<1x1x8x128xf32> to vector<8x128xf32>
    %42 = arith.addf %41, %27 : vector<8x128xf32>
    %c0_29 = arith.constant 0 : index
    %c2_30 = arith.constant 2 : index
    %c0_31 = arith.constant 0 : index
    %c0_32 = arith.constant 0 : index
    %43 = vector.load %arg4[%c0_29, %c2_30, %c0_31, %c0_32] : memref<1x3x8x128xf32, #tpu.memory_space<vmem>>, vector<1x1x8x128xf32>
    %44 = vector.shape_cast %43 : vector<1x1x8x128xf32> to vector<8x128xf32>
    %45 = vector.shape_cast %42 : vector<8x128xf32> to vector<1x1x8x128xf32>
    tpu.vector_store %arg4[%c0_29, %c2_30, %c0_31, %c0_32], %45 {strides = array<i32>} : memref<1x3x8x128xf32, #tpu.memory_space<vmem>>, vector<1x1x8x128xf32>,
    return
  }
  func.func @transform_0(%arg0: i32, %arg1: i32) -> (i32, i32) {
    %c1_i32 = arith.constant 1 : i32
    %0 = arith.muli %arg0, %c1_i32 : i32
    %1 = arith.addi %0, %arg1 : i32
    %c0_i32 = arith.constant 0 : i32
    %2 = arith.minsi %1, %c0_i32 : i32
    %c0_i32_0 = arith.constant 0 : i32
    %c0_i32_1 = arith.constant 0 : i32
    return %2, %c0_i32_0 : i32, i32
  }
  func.func @transform_1(%arg0: i32, %arg1: i32) -> (i32, i32) {
    %c1_i32 = arith.constant 1 : i32
    %0 = arith.muli %arg0, %c1_i32 : i32
    %1 = arith.addi %0, %arg1 : i32
    %c0_i32 = arith.constant 0 : i32
    %2 = arith.minsi %1, %c0_i32 : i32
    %c0_i32_0 = arith.constant 0 : i32
    %c0_i32_1 = arith.constant 0 : i32
    return %2, %c0_i32_0 : i32, i32
  }
  func.func @transform_2(%arg0: i32, %arg1: i32) -> (i32, i32, i32, i32) {
    %c0_i32 = arith.constant 0 : i32
    %c0_i32_0 = arith.constant 0 : i32
    %c0_i32_1 = arith.constant 0 : i32
    %c0_i32_2 = arith.constant 0 : i32
    return %arg0, %c0_i32, %c0_i32_0, %c0_i32_1 : i32, i32, i32, i32
  }
}

</mosaic_0001>

<llo_original>
// kernel: tpu_custom_call.1
$region0: #{tpu_custom_call.1}
  #allocation0 [shape = 'u32[]', space=smem, size = 0x4, offset = 0x4, fixed_abs, tag = 'smem constant byte address 0x4 - core index']
  #allocation1 [shape = 'u32[144,128]{1,0:T(1,128)}', space=vmem, size = 0x12000, scoped, tag = 'internal scratch']
  %s0 = inlined_call_operand.hbm [shape: f32[16,128], index: 0, kind: input, shape index: {}]
  %s1 = inlined_call_operand.hbm [shape: f32[16,128], index: 1, kind: input, shape index: {}]
  %s2 = inlined_call_operand.hbm [shape: f32[1,3,8,128], index: 2, kind: output, shape index: {}]
  %s3 = sld [smem:[#allocation0]]
  $region30: #{tpu_custom_call.1} parent=0
    _
  %s5 = ssub.s32 1, %s3
  %s6 = scalar_select 0, %s5, %s3
  $region1: #{tpu_custom_call.1} parent=0
    #allocation2 [shape = 'u8[8192]{0}', space=vmem, size = 0x2000, scoped, tag = 'input window, operand 0, single buffered']
    #allocation3 [shape = 's32[1]{0}', space=sflag, size = 0x4, scoped, tag = 'scoped memory for tpu_custom_call.1']
    #allocation4 [shape = 's32[1]{0}', space=sflag, size = 0x4, scoped, tag = 'scoped memory for tpu_custom_call.1']
    #allocation5 [shape = 'u8[8192]{0}', space=vmem, size = 0x2000, scoped, tag = 'input window, operand 1, single buffered']
    #allocation6 [shape = 's32[1]{0}', space=sflag, size = 0x4, scoped, tag = 'scoped memory for tpu_custom_call.1']
    #allocation7 [shape = 'u8[12288]{0}', space=vmem, size = 0x3000, scoped, tag = 'output window, operand 0, single buffered']
    %7 = vsyncpa [#allocation3], 0
    %8 = vsyncpa [#allocation6], 0
    %9 = vsyncpa [#allocation4], 0
    // Predicated region
    $region2: #{tpu_custom_call.1} parent=1 // pred_check
      _
    $region3: #{tpu_custom_call.1} parent=1 // pred_check_branch
      %11 = sbr.rel (0) target = $region5
    $region4: #{tpu_custom_call.1} parent=1 // pred_region
      %s12 = sadd.s32 0, 0
      %p13 = scmp.lt.s32.totalorder %s12, 0
      %s14 = scalar_select %p13, %s12, 0
      %s15 = smul.u32 2, %s14
      %s17 = ssub.s32 256, 256
      %18 = vsyncadd [#allocation3], %s17
      %s19 = smul.addr %s15, 128
      %s20 = scalar_lea.hbm %s0, %s19
      %s21 = sshll.u32 [#allocation2], 4
      %s22 = int_to_ptr.vmem [resolvable:$true] %s21
      %27 = dma.hbm_to_vmem [thread:$0]  %s20, 256, %s22, [#allocation3], 128, 128, 8
    $region5: #{tpu_custom_call.1} parent=1 // pred_fallthru
      _
    // Predicated region
    $region6: #{tpu_custom_call.1} parent=1 // pred_check
      _
    $region7: #{tpu_custom_call.1} parent=1 // pred_check_branch
      %29 = sbr.rel (0) target = $region9
    $region8: #{tpu_custom_call.1} parent=1 // pred_region
      %s30 = sadd.s32 0, 0
      %p31 = scmp.lt.s32.totalorder %s30, 0
      %s32 = scalar_select %p31, %s30, 0
      %s33 = smul.u32 2, %s32
      %s35 = ssub.s32 256, 256
      %36 = vsyncadd [#allocation6], %s35
      %s37 = smul.addr %s33, 128
      %s38 = scalar_lea.hbm %s1, %s37
      %s39 = sshll.u32 [#allocation5], 4
      %s40 = int_to_ptr.vmem [resolvable:$true] %s39
      %45 = dma.hbm_to_vmem [thread:$0]  %s38, 256, %s40, [#allocation6], 128, 128, 8
    $region9: #{tpu_custom_call.1} parent=1 // pred_fallthru
      _
    // Predicated region
    $region10: #{tpu_custom_call.1} parent=1 // pred_check
      _
    $region11: #{tpu_custom_call.1} parent=1 // pred_check_branch
      %47 = sbr.rel (0) target = $region13
    $region12: #{tpu_custom_call.1} parent=1 // pred_region
      %48 = dma.done [#allocation3], 256
    $region13: #{tpu_custom_call.1} parent=1 // pred_fallthru
      _
    // Predicated region
    $region14: #{tpu_custom_call.1} parent=1 // pred_check
      _
    $region15: #{tpu_custom_call.1} parent=1 // pred_check_branch
      %50 = sbr.rel (0) target = $region17
    $region16: #{tpu_custom_call.1} parent=1 // pred_region
      %51 = dma.done [#allocation6], 256
    $region17: #{tpu_custom_call.1} parent=1 // pred_fallthru
      _
    %s52 = sadd.s32 0, 0
    %p53 = scmp.lt.s32.totalorder %s52, 0
    %s54 = scalar_select %p53, %s52, 0
    %s55 = smul.u32 2, %s54
    %s56 = sadd.s32 0, 0
    %p57 = scmp.lt.s32.totalorder %s56, 0
    %s58 = scalar_select %p57, %s56, 0
    %s59 = smul.u32 2, %s58
    %p60 = scmp.eq.s32.totalorder 0, 0
    // Predicated region
    $region18: #{tpu_custom_call.1} parent=1 // pred_check
      %p61 = pneg %p60
    $region19: #{tpu_custom_call.1} parent=1 // pred_check_branch
      %63 = sbr.rel (%p61) target = $region21
    $region20: #{tpu_custom_call.1} parent=1 // pred_region
      %64 = vst [vmem:[#allocation7] sm:$0xff] 0.0
      %65 = vst [vmem:[#allocation7 + $0x8] sm:$0xff] 0.0
      %66 = vst [vmem:[#allocation7 + $0x10] sm:$0xff] 0.0
    $region21: #{tpu_custom_call.1} parent=1 // pred_fallthru
      _
    %v67 = vld [vmem:[#allocation2] sm:$0xff]
    %v68 = vld [vmem:[#allocation2 + $0x8] sm:$0xff]
    %v69 = vld [vmem:[#allocation5] sm:$0xff]
    %v70 = vld [vmem:[#allocation5 + $0x8] sm:$0xff]
    %v71 = vand.u32 2147483647, %v67
    %v72 = vand.u32 2147483647, %v68
    %v73 = vsub.f32 0.0, %v71
    %v74 = vsub.f32 0.0, %v72
    %v75 = vmul.f32 %v73, 1.442695
    %v76 = vpow.pop %v75
    %v77 = vmul.f32 %v74, 1.442695
    %v78 = vpow.pop %v77
    %v79 = vadd.f32 %v76, 1.0
    %v80 = vadd.f32 %v78, 1.0
    %v81 = vrcp.pop %v79
    %v82 = vrcp.pop %v80
    %v83 = vmul.f32 %v79, %v81
    %v84 = vmul.f32 %v80, %v82
    %v85 = vsub.f32 2.0, %v83
    %v86 = vsub.f32 2.0, %v84
    %v87 = vmul.f32 %v81, %v85
    %v88 = vmul.f32 %v82, %v86
    %vm89 = vcmp.ge.f32.partialorder %v67, 0.0
    %vm90 = vcmp.ge.f32.partialorder %v68, 0.0
    %v91 = vsub.f32 1.0, %v87
    %v92 = vsub.f32 1.0, %v88
    %v93 = vsel %vm89, %v87, %v91
    %v94 = vsel %vm90, %v88, %v92
    %v95 = vmul.f32 %v93, %v69
    %v96 = vmul.f32 %v94, %v70
    %v97 = vadd.f32 %v95, %v96
    %v98 = vadd.f32 %v93, %v94
    %v99 = vadd.f32 %v69, %v70
    %v100 = vld [vmem:[#allocation7] sm:$0xff]
    %v101 = vadd.f32 %v100, %v97
    %102 = vst [vmem:[#allocation7] sm:$0xff] %v101
    %s103 = scalar_lea.vmem [#allocation7], 8
    %v104 = vld [vmem:[%s103] sm:$0xff]
    %v105 = vadd.f32 %v104, %v98
    %106 = vst [vmem:[%s103] sm:$0xff] %v105
    %s107 = scalar_lea.vmem [#allocation7], 16
    %v108 = vld [vmem:[%s107] sm:$0xff]
    %v109 = vadd.f32 %v108, %v99
    %110 = vst [vmem:[%s107] sm:$0xff] %v109
    // Predicated region
    $region22: #{tpu_custom_call.1} parent=1 // pred_check
      _
    $region23: #{tpu_custom_call.1} parent=1 // pred_check_branch
      %112 = sbr.rel (0) target = $region25
    $region24: #{tpu_custom_call.1} parent=1 // pred_region
      %s114 = ssub.s32 384, 384
      %115 = vsyncadd [#allocation4], %s114
      %s116 = sshll.u32 [#allocation7], 4
      %s117 = int_to_ptr.vmem [resolvable:$true] %s116
      %122 = dma.vmem_to_hbm [thread:$0]  %s117, 384, %s2, [#allocation4], 128, 128, 8
    $region25: #{tpu_custom_call.1} parent=1 // pred_fallthru
      _
    // Predicated region
    $region26: #{tpu_custom_call.1} parent=1 // pred_check
      _
    $region27: #{tpu_custom_call.1} parent=1 // pred_check_branch
      %124 = sbr.rel (0) target = $region29
    $region28: #{tpu_custom_call.1} parent=1 // pred_region
      %125 = dma.done [#allocation4], 384
    $region29: #{tpu_custom_call.1} parent=1 // pred_fallthru
      _
    %126 = vsyncpa [#allocation3], 1
    %127 = vsyncpa [#allocation6], 1
    %128 = vsyncpa [#allocation4], 1

</llo_original>
